<compile_context>
chip_gen: v7x
topology: tpu7x:2x2x1
jax: 0.10.0
libtpu: 0.0.40
codegen_flags: <defaults>
</compile_context>

<pallas_src>
import jax
import jax.numpy as jnp
from jax.experimental import pallas as pl
from jax.experimental.pallas import tpu as pltpu


# ---------------------------------------------------------------------------
# Kernels
# ---------------------------------------------------------------------------
def _fused_aug_kernel(s_ref, x_ref, o_ref):
    """Path A. s_ref: (3,) folded scalars [A, B, C] in SMEM (scalar prefetch).
    x_ref/o_ref: (block_rows, H*W) tiles; full lane extent -> exact row mean."""
    x = x_ref[...].astype(jnp.float32)
    a = s_ref[0]
    b = s_ref[1]
    c = s_ref[2]
    mean = jnp.mean(x, axis=-1, keepdims=True)  # per (n, c) spatial mean
    o_ref[...] = (a * x + c * mean + b).astype(o_ref.dtype)


def _fused_aug_premean_kernel(s_ref, x_ref, m_ref, o_ref):
    """Path B. Pure elementwise: mean is a precomputed (block_rows, 1) input."""
    x = x_ref[...].astype(jnp.float32)
    mean = m_ref[...]  # already float32
    a = s_ref[0]
    b = s_ref[1]
    c = s_ref[2]
    o_ref[...] = (a * x + c * mean + b).astype(o_ref.dtype)


# ---------------------------------------------------------------------------
# Parameter glue: per-layer fold + whole-module affine composition (pure JAX)
# ---------------------------------------------------------------------------
def _fold_layer_scalars(raw_weights, temperature, magnitudes):
    w = jax.nn.softmax(raw_weights.astype(jnp.float32) / jnp.float32(temperature))
    m = magnitudes.astype(jnp.float32)
    A = w[0] + w[1] * (1.0 + m[0]) + w[2] + w[3] * (1.0 + m[2])
    B = w[2] * m[1]
    C = -w[3] * m[2]
    return A, B, C


def _fold_module_scalars(layer_params):
    """Compose all layers into one (A, B, C): y = A*x + C*mean(x) + B."""
    A = jnp.float32(1.0)
    B = jnp.float32(0.0)
    C = jnp.float32(0.0)
    for raw_weights, temperature, magnitudes in layer_params:
        Ai, Bi, Ci = _fold_layer_scalars(raw_weights, temperature, magnitudes)
        # All RHS terms use the OLD (A, B, C); tuple assignment keeps that.
        A, C, B = Ai * A, Ai * C + Ci * (A + C), (Ai + Ci) * B + Bi
    return A, B, C


# ---------------------------------------------------------------------------
# VMEM budget & tile choosers (generation-aware)
# ---------------------------------------------------------------------------
def _vmem_budget_bytes():
    cap = 64 * 1024 * 1024  # conservative fallback (= v7x per-core VMEM)
    try:
        cap = int(getattr(pltpu.get_tpu_info(), "vmem_capacity_bytes", cap))
    except Exception:
        pass
    # <= 3/4 of physical, never more than 64 MiB: 64 MiB on v5e/v6e (128 MiB
    # physical), 48 MiB on v7x (64 MiB physical).
    return min((cap * 3) // 4, 64 * 1024 * 1024)


def _row_multiple(itemsize):
    # Native sublane tiling: f32 -> 8, bf16 -> 16, int8/fp8 -> 32.
    return {4: 8, 2: 16, 1: 32}.get(itemsize, 8)


def _choose_block_rows(rows, cols, itemsize, budget_bytes, row_mult):
    """Path A row-block.  Returns None if even the minimum block won't fit."""
    # 2x double-buffered input + 2x output + one in-kernel f32 working copy.
    per_row = cols * (2 * itemsize + 2 * itemsize + 4)
    usable = int(budget_bytes * 0.8)  # ~20% headroom for compiler scratch
    if rows <= row_mult:
        return rows if rows * per_row <= usable else None  # block == full rows
    max_rows_budget = (usable // per_row) // row_mult * row_mult
    if max_rows_budget < row_mult:
        return None
    rows_padded = ((rows + row_mult - 1) // row_mult) * row_mult
    block = min(max_rows_budget, rows_padded)
    # Keep >= 2 grid steps when possible so the "parallel" axis can split
    # across v7x's two TensorCores (neutral on v5e/v6e).
    if block >= rows:
        half = (((rows + 1) // 2) + row_mult - 1) // row_mult * row_mult
        block = max(row_mult, min(block, half))
    return block


def _choose_premean_blocks(rows, cols, itemsize, budget_bytes, row_mult):
    """Path B (row_block, lane_block)."""
    per_elem = 2 * itemsize + 2 * itemsize + 4
    usable = int(budget_bytes * 0.8)
    if cols <= 128:
        lane_block = cols
    else:
        max_lane = max(128, (usable // (row_mult * per_elem)) // 128 * 128)
        lane_block = max(128, min(cols // 128 * 128, max_lane))
    if rows <= row_mult:
        row_block = rows
    else:
        max_rows = max(row_mult,
                       (usable // (lane_block * per_elem)) // row_mult * row_mult)
        rows_padded = ((rows + row_mult - 1) // row_mult) * row_mult
        row_block = min(max_rows, rows_padded)
    return row_block, lane_block


# ---------------------------------------------------------------------------
# Module forward (single fused pallas_call)
# ---------------------------------------------------------------------------
def augmentation_module_forward(x, layer_params, *, force_premean=False):
    """AugmentationModule.forward: all layers fused into one HBM pass."""
    assert x.ndim == 4, "expected NCHW input"
    if x.dtype not in (jnp.float32, jnp.bfloat16):
        raise ValueError("supported I/O dtypes: float32, bfloat16")

    N, C, H, W = x.shape
    rows, cols = N * C, H * W
    itemsize = jnp.dtype(x.dtype).itemsize
    row_mult = _row_multiple(itemsize)
    budget = _vmem_budget_bytes()

    A, B, Cc = _fold_module_scalars(layer_params)
    scalars = jnp.stack([A, B, Cc]).astype(jnp.float32)

    x2 = x.reshape(rows, cols)

    block_rows = None if force_premean else _choose_block_rows(
        rows, cols, itemsize, budget, row_mult)

    # NOTE: input_output_aliases={1: 0} (donate x2 into the output) would save
    # an output allocation, but it mutates the caller's activation buffer; left
    # off for safety of the forward-only API.
    if block_rows is not None:
        # ---- Path A: row tiling, full lane extent, in-kernel per-row mean ----
        grid = (pl.cdiv(rows, block_rows),)
        out2 = pl.pallas_call(
            _fused_aug_kernel,
            out_shape=jax.ShapeDtypeStruct((rows, cols), x.dtype),
            grid_spec=pltpu.PrefetchScalarGridSpec(
                num_scalar_prefetch=1,                      # [A, B, C] -> SMEM
                grid=grid,
                in_specs=[pl.BlockSpec((block_rows, cols), lambda i, s: (i, 0))],
                out_specs=pl.BlockSpec((block_rows, cols), lambda i, s: (i, 0)),
            ),
            compiler_params=pltpu.CompilerParams(
                dimension_semantics=("parallel",),          # megacore-shardable
                vmem_limit_bytes=budget,
            ),
            cost_estimate=pl.CostEstimate(
                flops=4 * rows * cols,
                transcendentals=0,
                bytes_accessed=2 * itemsize * rows * cols,
            ),
        )(scalars, x2)
    else:
        # ---- Path B: huge H*W — precompute per-row means (one extra read of
        # x, only for shapes where a full row can't fit the VMEM budget),
        # kernel is pure elementwise with 2-D tiling. ----
        mean = jnp.mean(x2.astype(jnp.float32), axis=1, keepdims=True)
        row_block, lane_block = _choose_premean_blocks(
            rows, cols, itemsize, budget, row_mult)
        grid = (pl.cdiv(rows, row_block), pl.cdiv(cols, lane_block))
        out2 = pl.pallas_call(
            _fused_aug_premean_kernel,
            out_shape=jax.ShapeDtypeStruct((rows, cols), x.dtype),
            grid_spec=pltpu.PrefetchScalarGridSpec(
                num_scalar_prefetch=1,
                grid=grid,
                in_specs=[
                    pl.BlockSpec((row_block, lane_block), lambda i, j, s: (i, j)),
                    pl.BlockSpec((row_block, 1), lambda i, j, s: (i, 0)),
                ],
                out_specs=pl.BlockSpec((row_block, lane_block),
                                       lambda i, j, s: (i, j)),
            ),
            compiler_params=pltpu.CompilerParams(
                dimension_semantics=("parallel", "parallel"),
                vmem_limit_bytes=budget,
            ),
            cost_estimate=pl.CostEstimate(
                flops=3 * rows * cols,
                transcendentals=0,
                bytes_accessed=2 * itemsize * rows * cols + 4 * rows,
            ),
        )(scalars, x2, mean)

    return out2.reshape(N, C, H, W)


# ---------------------------------------------------------------------------
# Pure-JAX reference mirroring the PyTorch training-mode forward (sequential).
# ---------------------------------------------------------------------------
def _layer_reference(x, raw_weights, temperature, magnitudes):
    w = jax.nn.softmax(raw_weights / temperature)
    m1, m2, m3 = magnitudes
    a0 = x
    a1 = x * (1.0 + m1)
    a2 = x + m2
    mean = jnp.mean(x, axis=(2, 3), keepdims=True)
    a3 = mean + (x - mean) * (1.0 + m3)
    stack = jnp.stack([a0, a1, a2, a3])
    return (stack * w.reshape(-1, 1, 1, 1, 1)).sum(0)


def _module_reference(x, layer_params):
    for raw_weights, temperature, magnitudes in layer_params:
        x = _layer_reference(x, raw_weights, temperature, magnitudes)
    return x


if __name__ == "__main__":
    key = jax.random.PRNGKey(0)
    k1, k2, k3 = jax.random.split(key, 3)

    # TODO(synk): eval-mode Categorical sampling of a single augmentation,
    # freeze_probs() and the parameter/gradient accessor properties are
    # host-side bookkeeping with no Pallas equivalent; only the training-mode
    # weighted-sum forward is ported.

    layer_params = [
        (jnp.array([0.4, 0.2, 0.8, 0.6], dtype=jnp.float32), 0.5,
         jnp.array([0.3, 0.1, 0.5], dtype=jnp.float32)),
        (jnp.array([0.1, 0.7, 0.3, 0.9], dtype=jnp.float32), 1.0,
         jnp.array([0.2, 0.4, 0.25], dtype=jnp.float32)),
    ]

    # 1) Small demo shape (single-tile Path A).
    x = jax.random.normal(k1, (2, 4, 16, 16), dtype=jnp.float32)
    out = jax.block_until_ready(augmentation_module_forward(x, layer_params))
    ref = _module_reference(x, layer_params)
    assert out.shape == x.shape
    assert jnp.allclose(out, ref, atol=1e-4, rtol=1e-4), "mismatch (small)"

    # 2) Larger shape: multi-step, pipelined row tiling (grid >= 2).
    x2 = jax.random.normal(k2, (4, 8, 32, 32), dtype=jnp.float32)
    out2 = jax.block_until_ready(augmentation_module_forward(x2, layer_params))
    ref2 = _module_reference(x2, layer_params)
    assert jnp.allclose(out2, ref2, atol=1e-4, rtol=1e-4), "mismatch (tiled)"

    # 3) Awkward shape (28x28, rows not a multiple of 8): cdiv grid + ragged
    #    last row block.
    x3 = jax.random.normal(k3, (3, 5, 28, 28), dtype=jnp.float32)
    out3 = jax.block_until_ready(augmentation_module_forward(x3, layer_params))
    ref3 = _module_reference(x3, layer_params)
    assert jnp.allclose(out3, ref3, atol=1e-4, rtol=1e-4), "mismatch (ragged)"

    # 4) bf16 I/O (compute stays f32 in-kernel; output rounding only).
    xb = x.astype(jnp.bfloat16)
    outb = jax.block_until_ready(augmentation_module_forward(xb, layer_params))
    refb = _module_reference(xb.astype(jnp.float32), layer_params)
    assert jnp.allclose(outb.astype(jnp.float32), refb, atol=5e-2, rtol=5e-2), \
        "mismatch (bf16)"

    # 5) Path B (precomputed-mean, 2-D tiled) exercised via the force flag.
    out5 = jax.block_until_ready(
        augmentation_module_forward(x2, layer_params, force_premean=True))
    assert jnp.allclose(out5, ref2, atol=1e-4, rtol=1e-4), "mismatch (premean)"

    print("KERNEL_OK")
</pallas_src>

<mosaic_0001>
module attributes {stable_mosaic.version = 11 : i64} {
  func.func @_fused_aug_kernel(%arg0: i32, %arg1: memref<3xf32, #tpu.memory_space<smem>>, %arg2: memref<8x256xf32, #tpu.memory_space<vmem>>, %arg3: memref<8x256xf32, #tpu.memory_space<vmem>>) attributes {dimension_semantics = [#tpu.dimension_semantics<parallel>], iteration_bounds = array<i64: 1>, scalar_prefetch = 1 : i64, scratch_operands = 0 : i64, tpu.core_type = #tpu.core_type<tc>, window_params = [{transform_indices = @transform_0, window_bounds = array<i64: 8, 256>}, {transform_indices = @transform_1, window_bounds = array<i64: 8, 256>}]} {
    %c0 = arith.constant 0 : index
    %c0_0 = arith.constant 0 : index
    %0 = vector.load %arg2[%c0, %c0_0] : memref<8x256xf32, #tpu.memory_space<vmem>>, vector<8x256xf32>
    %c0_1 = arith.constant 0 : index
    %1 = memref.load %arg1[%c0_1] : memref<3xf32, #tpu.memory_space<smem>>
    %c1 = arith.constant 1 : index
    %2 = memref.load %arg1[%c1] : memref<3xf32, #tpu.memory_space<smem>>
    %c2 = arith.constant 2 : index
    %3 = memref.load %arg1[%c2] : memref<3xf32, #tpu.memory_space<smem>>
    %cst = arith.constant dense<0.000000e+00> : vector<8xf32>
    %4 = vector.multi_reduction <add>, %0, %cst [1] : vector<8x256xf32> to vector<8xf32>
    %5 = vector.shape_cast %4 : vector<8xf32> to vector<8x1xf32>
    %cst_2 = arith.constant 2.560000e+02 : f32
    %6 = vector.broadcast %cst_2 : f32 to vector<8x1xf32>
    %7 = arith.divf %5, %6 : vector<8x1xf32>
    %8 = vector.broadcast %1 : f32 to vector<8x256xf32>
    %9 = arith.mulf %8, %0 : vector<8x256xf32>
    %10 = vector.broadcast %3 : f32 to vector<8x1xf32>
    %11 = arith.mulf %10, %7 : vector<8x1xf32>
    %12 = vector.broadcast %11 : vector<8x1xf32> to vector<8x256xf32>
    %13 = arith.addf %9, %12 : vector<8x256xf32>
    %14 = vector.broadcast %2 : f32 to vector<8x256xf32>
    %15 = arith.addf %13, %14 : vector<8x256xf32>
    %c0_3 = arith.constant 0 : index
    %c0_4 = arith.constant 0 : index
    %16 = vector.load %arg3[%c0_3, %c0_4] : memref<8x256xf32, #tpu.memory_space<vmem>>, vector<8x256xf32>
    tpu.vector_store %arg3[%c0_3, %c0_4], %15 {strides = array<i32>} : memref<8x256xf32, #tpu.memory_space<vmem>>, vector<8x256xf32>,
    return
  }
  func.func @transform_0(%arg0: i32, %arg1: memref<3xf32, #tpu.memory_space<smem>>) -> (i32, i32) {
    %c0_i32 = arith.constant 0 : i32
    %c0_i32_0 = arith.constant 0 : i32
    return %arg0, %c0_i32 : i32, i32
  }
  func.func @transform_1(%arg0: i32, %arg1: memref<3xf32, #tpu.memory_space<smem>>) -> (i32, i32) {
    %c0_i32 = arith.constant 0 : i32
    %c0_i32_0 = arith.constant 0 : i32
    return %arg0, %c0_i32 : i32, i32
  }
}

</mosaic_0001>

<llo_original>
// kernel: tpu_custom_call.1
$region0: #{tpu_custom_call.1}
  #allocation0 [shape = 'u32[]', space=smem, size = 0x4, offset = 0x4, fixed_abs, tag = 'smem constant byte address 0x4 - core index']
  #allocation1 [shape = 'u32[144,128]{1,0:T(1,128)}', space=vmem, size = 0x12000, scoped, tag = 'internal scratch']
  #allocation2 [shape = 's32[1]{0}', space=sflag, size = 0x4, scoped, tag = 'scoped memory for tpu_custom_call.1']
  #allocation3 [shape = 'u8[512]{0}', space=smem, size = 0x200, scoped, tag = 'prefetched SMEM operand 0']
  %s0 = inlined_call_operand.hbm [shape: f32[3], index: 0, kind: input, shape index: {}]
  %s1 = inlined_call_operand.hbm [shape: f32[8,256], index: 1, kind: input, shape index: {}]
  %s2 = inlined_call_operand.hbm [shape: f32[8,256], index: 2, kind: output, shape index: {}]
  %s3 = sld [smem:[#allocation0]]
  $region18: #{tpu_custom_call.1} parent=0
    _
  %s5 = ssub.s32 1, %s3
  %s6 = scalar_select 0, %s5, %s3
  %8 = dma.hbm_to_smem %s0, 16, [#allocation3], [#allocation2]
  %9 = dma.done [#allocation2], 16
  %10 = sfence
  $region1: #{tpu_custom_call.1} parent=0
    #allocation4 [shape = 'u8[8192]{0}', space=vmem, size = 0x2000, scoped, tag = 'input window, operand 1, single buffered']
    #allocation5 [shape = 's32[1]{0}', space=sflag, size = 0x4, scoped, tag = 'scoped memory for tpu_custom_call.1']
    #allocation6 [shape = 's32[1]{0}', space=sflag, size = 0x4, scoped, tag = 'scoped memory for tpu_custom_call.1']
    #allocation7 [shape = 'u8[8192]{0}', space=vmem, size = 0x2000, scoped, tag = 'output window, operand 0, single buffered']
    %11 = vsyncpa [#allocation5], 0
    %12 = vsyncpa [#allocation6], 0
    // Predicated region
    $region2: #{tpu_custom_call.1} parent=1 // pred_check
      _
    $region3: #{tpu_custom_call.1} parent=1 // pred_check_branch
      %14 = sbr.rel (0) target = $region5
    $region4: #{tpu_custom_call.1} parent=1 // pred_region
      %s16 = ssub.s32 256, 256
      %17 = vsyncadd [#allocation5], %s16
      %s19 = sshll.u32 [#allocation4], 4
      %s20 = int_to_ptr.vmem [resolvable:$true] %s19
      %22 = dma.hbm_to_vmem [thread:$0]  %s1, 256, %s20, [#allocation5]
    $region5: #{tpu_custom_call.1} parent=1 // pred_fallthru
      _
    // Predicated region
    $region6: #{tpu_custom_call.1} parent=1 // pred_check
      _
    $region7: #{tpu_custom_call.1} parent=1 // pred_check_branch
      %24 = sbr.rel (0) target = $region9
    $region8: #{tpu_custom_call.1} parent=1 // pred_region
      %25 = dma.done [#allocation5], 256
    $region9: #{tpu_custom_call.1} parent=1 // pred_fallthru
      _
    %v26 = vld [vmem:[#allocation4] sm:$0xff]
    %v27 = vld [vmem:[#allocation4 + $0x8] sm:$0xff]
    %s28 = sld [smem:[#allocation3]]
    %s29 = sld [smem:[#allocation3 + $0x1]]
    %s30 = sld [smem:[#allocation3 + $0x2]]
    %v31 = vadd.f32 %v26, %v27
    %32 = vadd.xlane.f32.xlu0 %v31
    %v33 = vpop.xlane.xlu0 %32
    %v34 = vrcp.pop 256.0
    %v35 = vmul.f32 %v33, %v34
    %v36 = vstv %s28
    %v37 = vmul.f32 %v36, %v26
    %v38 = vmul.f32 %v36, %v27
    %v39 = vstv %s30
    %v40 = vmul.f32 %v39, %v35
    %v41 = vadd.f32 %v37, %v40
    %v42 = vadd.f32 %v38, %v40
    %v43 = vstv %s29
    %v44 = vadd.f32 %v41, %v43
    %v45 = vadd.f32 %v42, %v43
    %46 = vst [vmem:[#allocation7] sm:$0xff] %v44
    %47 = vst [vmem:[#allocation7 + $0x8] sm:$0xff] %v45
    // Predicated region
    $region10: #{tpu_custom_call.1} parent=1 // pred_check
      _
    $region11: #{tpu_custom_call.1} parent=1 // pred_check_branch
      %49 = sbr.rel (0) target = $region13
    $region12: #{tpu_custom_call.1} parent=1 // pred_region
      %s51 = ssub.s32 256, 256
      %52 = vsyncadd [#allocation6], %s51
      %s54 = sshll.u32 [#allocation7], 4
      %s55 = int_to_ptr.vmem [resolvable:$true] %s54
      %57 = dma.vmem_to_hbm [thread:$0]  %s55, 256, %s2, [#allocation6]
    $region13: #{tpu_custom_call.1} parent=1 // pred_fallthru
      _
    // Predicated region
    $region14: #{tpu_custom_call.1} parent=1 // pred_check
      _
    $region15: #{tpu_custom_call.1} parent=1 // pred_check_branch
      %59 = sbr.rel (0) target = $region17
    $region16: #{tpu_custom_call.1} parent=1 // pred_region
      %60 = dma.done [#allocation6], 256
    $region17: #{tpu_custom_call.1} parent=1 // pred_fallthru
      _
    %61 = vsyncpa [#allocation5], 1
    %62 = vsyncpa [#allocation6], 1

</llo_original>
